<compile_context>
chip_gen: v6e
topology: v6e:2x2x1
jax: 0.10.0
libtpu: 0.0.40
codegen_flags: <defaults>
</compile_context>

<pallas_src>
import functools

import jax
import jax.numpy as jnp
from jax.experimental import pallas as pl
from jax.experimental.pallas import tpu as pltpu

BN_EPS = 1e-5
LANE = 128
SUBLANE = 8


def _full_spec(shape):
    nd = len(shape)
    return pl.BlockSpec(shape, lambda i, _nd=nd: (0,) * _nd)


def _round_up(x, m):
    return ((x + m - 1) // m) * m


# --------------------------------------------------------------------------
# Fused kernel: binarize(x) -> [ (x_bin @ w_bin) -> folded BN -> sign ]*L
#               -> batched TALL voting matmul -> per-class vote counts.
#
# refs layout:
#   x_ref, (w_l, scale_l, bias_l) * num_hidden, w_out_ref, flip_ref, votes_ref
# --------------------------------------------------------------------------
def _fused_tall_kernel(*refs, num_hidden):
    x_ref = refs[0]
    hidden_refs = refs[1:1 + 3 * num_hidden]
    w_out_ref = refs[1 + 3 * num_hidden]
    flip_ref = refs[2 + 3 * num_hidden]
    votes_ref = refs[3 + 3 * num_hidden]

    # binarize(input); keep compare/select in f32, feed the MXU bf16.
    feat = jnp.where(x_ref[...] > 0.0, 1.0, -1.0).astype(jnp.float32)

    for l in range(num_hidden):
        w_ref = hidden_refs[3 * l + 0]        # pre-binarized bf16 [in, out]
        scale_ref = hidden_refs[3 * l + 1]    # folded BN scale [1, out] f32
        bias_ref = hidden_refs[3 * l + 2]     # folded BN bias  [1, out] f32
        y = jnp.dot(feat.astype(jnp.bfloat16), w_ref[...],
                    preferred_element_type=jnp.float32)          # [B, H] f32
        y = y * scale_ref[...] + bias_ref[...]                    # eval-mode BN (folded)
        feat = jnp.where(y > 0.0, 1.0, -1.0).astype(jnp.float32)  # BinaryActivation

    # TALL voting: apply all num_iter flip masks at once -> one big MXU pass.
    T, B, H = flip_ref.shape
    flipped = (flip_ref[...] * feat[None, :, :]).reshape(T * B, H)  # +/-1, f32
    logits = jnp.dot(flipped.astype(jnp.bfloat16), w_out_ref[...],
                     preferred_element_type=jnp.float32)            # [T*B, Cpad]
    c_pad = logits.shape[-1]
    votes_ref[...] = (logits > 0.0).astype(jnp.int32).reshape(T, B, c_pad).sum(axis=0)


# --------------------------------------------------------------------------
# Wrapper: padding, flip-mask generation, pallas_call, argmax / threshold.
# --------------------------------------------------------------------------
def tall_classifier_forward(x, params, *, num_iter, flip_p, majority_threshold,
                            rng_key):
    B = x.shape[0]
    x_flat = x.reshape(B, -1).astype(jnp.float32)          # flatten(1), NCHW -> [B, C*H*W]

    # Pad batch to a multiple of 8 sublanes (keeps in-kernel reshapes layout-clean).
    b_pad = max(SUBLANE, _round_up(B, SUBLANE))
    if b_pad != B:
        x_flat = jnp.pad(x_flat, ((0, b_pad - B), (0, 0)))

    hidden = params["hidden"]                 # [(w_bin bf16 [in,out], scale, bias), ...]
    w_out_pad = params["w_out_bin_pad"]       # [H_last, C_pad] bf16 (+/-1, zero-padded cols)
    num_classes = params["num_classes"]
    h_last, c_pad = w_out_pad.shape

    # Bernoulli(flip_p) bit-flip augmentation as +/-1 sign factors, all
    # iterations at once. (Different RNG stream than torch.rand_like.)
    flip = jax.random.bernoulli(rng_key, flip_p, (num_iter, b_pad, h_last))
    flip_signs = jnp.where(flip, -1.0, 1.0).astype(jnp.float32)

    inputs = [x_flat]
    in_specs = [_full_spec(x_flat.shape)]
    for (w_bin, scale, bias) in hidden:
        inputs += [w_bin, scale, bias]
        in_specs += [_full_spec(w_bin.shape), _full_spec(scale.shape),
                     _full_spec(bias.shape)]
    inputs += [w_out_pad, flip_signs]
    in_specs += [_full_spec(w_out_pad.shape), _full_spec(flip_signs.shape)]

    kern = functools.partial(_fused_tall_kernel, num_hidden=len(hidden))
    votes_pad = pl.pallas_call(
        kern,
        out_shape=jax.ShapeDtypeStruct((b_pad, c_pad), jnp.int32),
        grid_spec=pl.GridSpec(
            grid=(1,),
            in_specs=in_specs,
            out_specs=_full_spec((b_pad, c_pad)),
        ),
        compiler_params=pltpu.CompilerParams(
            dimension_semantics=("arbitrary",)),
    )(*inputs)

    votes = votes_pad[:B, :num_classes]
    pred = jnp.argmax(votes, axis=-1).astype(jnp.int32)
    if majority_threshold is not None:
        need = int(num_iter * majority_threshold)
        confident = jnp.max(votes, axis=-1) >= need
        pred = jnp.where(confident, pred, jnp.full_like(pred, -1))
    return pred, votes


# --------------------------------------------------------------------------
# Parameter construction: random float params, then pre-binarize weights
# (bf16 +/-1) and fold eval-mode BatchNorm into (scale, bias).
# --------------------------------------------------------------------------
def prepare_params(key, in_features, hidden_sizes, num_classes):
    hidden = []
    prev = in_features
    for h in hidden_sizes:
        key, kw, kg, kb, km, kv = jax.random.split(key, 6)
        w = jax.random.normal(kw, (prev, h), jnp.float32) * 0.1     # [in, out] (pre-transposed)
        gamma = 1.0 + 0.1 * jax.random.normal(kg, (1, h), jnp.float32)
        beta = 0.1 * jax.random.normal(kb, (1, h), jnp.float32)
        mean = 0.1 * jax.random.normal(km, (1, h), jnp.float32)
        var = 1.0 + 0.1 * jnp.abs(jax.random.normal(kv, (1, h), jnp.float32))

        w_bin = jnp.where(w > 0.0, 1.0, -1.0).astype(jnp.bfloat16)  # pre-binarized weights
        scale = (gamma * jax.lax.rsqrt(var + BN_EPS)).astype(jnp.float32)
        bias = (beta - scale * mean).astype(jnp.float32)            # folded eval BN
        hidden.append((w_bin, scale, bias))
        prev = h

    key, kw = jax.random.split(key)
    w_out = jax.random.normal(kw, (prev, num_classes), jnp.float32) * 0.1
    w_out_bin = jnp.where(w_out > 0.0, 1.0, -1.0).astype(jnp.bfloat16)
    c_pad = max(LANE, _round_up(num_classes, LANE))
    # zero-padded columns -> logits exactly 0 -> 0 votes; sliced off afterwards.
    w_out_bin_pad = jnp.pad(w_out_bin, ((0, 0), (0, c_pad - num_classes)))

    return {"hidden": hidden, "w_out_bin_pad": w_out_bin_pad,
            "num_classes": num_classes}


if __name__ == "__main__":
    # Small, forward-consistent shapes (NCHW input, flatten(1) -> 1024 features).
    B, C_in, H_sp, W_sp = 2, 4, 16, 16
    in_features = C_in * H_sp * W_sp          # 1024
    hidden_sizes = (128, 128)
    num_classes = 10
    num_iter = 30
    flip_p = 0.3
    majority_threshold = 0.5

    key = jax.random.PRNGKey(0)
    kx, kp, kf = jax.random.split(key, 3)
    x = jax.random.normal(kx, (B, C_in, H_sp, W_sp), jnp.float32)
    params = prepare_params(kp, in_features, hidden_sizes, num_classes)

    pred, votes = tall_classifier_forward(
        x, params, num_iter=num_iter, flip_p=flip_p,
        majority_threshold=majority_threshold, rng_key=kf)
    pred = jax.block_until_ready(pred)
    votes = jax.block_until_ready(votes)

    assert pred.shape == (B,)
    assert votes.shape == (B, num_classes)
    assert int(votes.min()) >= 0 and int(votes.max()) <= num_iter
    assert bool(jnp.all((pred >= -1) & (pred < num_classes)))
    print("KERNEL_OK")
</pallas_src>

<mosaic_0001>
module attributes {stable_mosaic.version = 11 : i64} {
  func.func @_fused_tall_kernel(%arg0: i32, %arg1: memref<8x1024xf32, #tpu.memory_space<vmem>>, %arg2: memref<1024x128xbf16, #tpu.memory_space<vmem>>, %arg3: memref<1x128xf32, #tpu.memory_space<vmem>>, %arg4: memref<1x128xf32, #tpu.memory_space<vmem>>, %arg5: memref<128x128xbf16, #tpu.memory_space<vmem>>, %arg6: memref<1x128xf32, #tpu.memory_space<vmem>>, %arg7: memref<1x128xf32, #tpu.memory_space<vmem>>, %arg8: memref<128x128xbf16, #tpu.memory_space<vmem>>, %arg9: memref<30x8x128xf32, #tpu.memory_space<vmem>>, %arg10: memref<8x128xi32, #tpu.memory_space<vmem>>) attributes {dimension_semantics = [#tpu.dimension_semantics<arbitrary>], iteration_bounds = array<i64: 1>, scalar_prefetch = 0 : i64, scratch_operands = 0 : i64, tpu.core_type = #tpu.core_type<tc>, window_params = [{pipeline_mode = #tpu.pipeline_mode<synchronous>, transform_indices = @transform_0, window_bounds = array<i64: 8, 1024>}, {pipeline_mode = #tpu.pipeline_mode<synchronous>, transform_indices = @transform_1, window_bounds = array<i64: 1024, 128>}, {pipeline_mode = #tpu.pipeline_mode<synchronous>, transform_indices = @transform_2, window_bounds = array<i64: 1, 128>}, {pipeline_mode = #tpu.pipeline_mode<synchronous>, transform_indices = @transform_3, window_bounds = array<i64: 1, 128>}, {pipeline_mode = #tpu.pipeline_mode<synchronous>, transform_indices = @transform_4, window_bounds = array<i64: 128, 128>}, {pipeline_mode = #tpu.pipeline_mode<synchronous>, transform_indices = @transform_5, window_bounds = array<i64: 1, 128>}, {pipeline_mode = #tpu.pipeline_mode<synchronous>, transform_indices = @transform_6, window_bounds = array<i64: 1, 128>}, {pipeline_mode = #tpu.pipeline_mode<synchronous>, transform_indices = @transform_7, window_bounds = array<i64: 128, 128>}, {pipeline_mode = #tpu.pipeline_mode<synchronous>, transform_indices = @transform_8, window_bounds = array<i64: 30, 8, 128>}, {pipeline_mode = #tpu.pipeline_mode<synchronous>, transform_indices = @transform_9, window_bounds = array<i64: 8, 128>}]} {
    %c0 = arith.constant 0 : index
    %c0_0 = arith.constant 0 : index
    %0 = vector.load %arg1[%c0, %c0_0] : memref<8x1024xf32, #tpu.memory_space<vmem>>, vector<8x1024xf32>
    %cst = arith.constant 0.000000e+00 : f32
    %1 = vector.broadcast %cst : f32 to vector<8x1024xf32>
    %2 = arith.cmpf ogt, %0, %1 : vector<8x1024xf32>
    %cst_1 = arith.constant 1.000000e+00 : f32
    %cst_2 = arith.constant -1.000000e+00 : f32
    %3 = vector.broadcast %cst_1 : f32 to vector<8x1024xf32>
    %4 = vector.broadcast %cst_2 : f32 to vector<8x1024xf32>
    %5 = arith.select %2, %3, %4 : vector<8x1024xi1>, vector<8x1024xf32>
    %6 = arith.truncf %5 : vector<8x1024xf32> to vector<8x1024xbf16>
    %c0_3 = arith.constant 0 : index
    %c0_4 = arith.constant 0 : index
    %7 = vector.load %arg2[%c0_3, %c0_4] : memref<1024x128xbf16, #tpu.memory_space<vmem>>, vector<1024x128xbf16>
    %cst_5 = arith.constant dense<0.000000e+00> : vector<8x128xf32>
    %8 = tpu.matmul %6, %7, %cst_5 {dimension_numbers = #tpu.dot_dimension_numbers<[1], [0], [0], [1], [0, 0, 1, 1], [], []>} : vector<8x1024xbf16>, vector<1024x128xbf16>, vector<8x128xf32> -> vector<8x128xf32>
    %c0_6 = arith.constant 0 : index
    %c0_7 = arith.constant 0 : index
    %9 = vector.load %arg3[%c0_6, %c0_7] : memref<1x128xf32, #tpu.memory_space<vmem>>, vector<1x128xf32>
    %10 = vector.broadcast %9 : vector<1x128xf32> to vector<8x128xf32>
    %11 = arith.mulf %8, %10 : vector<8x128xf32>
    %c0_8 = arith.constant 0 : index
    %c0_9 = arith.constant 0 : index
    %12 = vector.load %arg4[%c0_8, %c0_9] : memref<1x128xf32, #tpu.memory_space<vmem>>, vector<1x128xf32>
    %13 = vector.broadcast %12 : vector<1x128xf32> to vector<8x128xf32>
    %14 = arith.addf %11, %13 : vector<8x128xf32>
    %cst_10 = arith.constant 0.000000e+00 : f32
    %15 = vector.broadcast %cst_10 : f32 to vector<8x128xf32>
    %16 = arith.cmpf ogt, %14, %15 : vector<8x128xf32>
    %cst_11 = arith.constant 1.000000e+00 : f32
    %cst_12 = arith.constant -1.000000e+00 : f32
    %17 = vector.broadcast %cst_11 : f32 to vector<8x128xf32>
    %18 = vector.broadcast %cst_12 : f32 to vector<8x128xf32>
    %19 = arith.select %16, %17, %18 : vector<8x128xi1>, vector<8x128xf32>
    %20 = arith.truncf %19 : vector<8x128xf32> to vector<8x128xbf16>
    %c0_13 = arith.constant 0 : index
    %c0_14 = arith.constant 0 : index
    %21 = vector.load %arg5[%c0_13, %c0_14] : memref<128x128xbf16, #tpu.memory_space<vmem>>, vector<128x128xbf16>
    %cst_15 = arith.constant dense<0.000000e+00> : vector<8x128xf32>
    %22 = tpu.matmul %20, %21, %cst_15 {dimension_numbers = #tpu.dot_dimension_numbers<[1], [0], [0], [1], [0, 0, 1, 1], [], []>} : vector<8x128xbf16>, vector<128x128xbf16>, vector<8x128xf32> -> vector<8x128xf32>
    %c0_16 = arith.constant 0 : index
    %c0_17 = arith.constant 0 : index
    %23 = vector.load %arg6[%c0_16, %c0_17] : memref<1x128xf32, #tpu.memory_space<vmem>>, vector<1x128xf32>
    %24 = vector.broadcast %23 : vector<1x128xf32> to vector<8x128xf32>
    %25 = arith.mulf %22, %24 : vector<8x128xf32>
    %c0_18 = arith.constant 0 : index
    %c0_19 = arith.constant 0 : index
    %26 = vector.load %arg7[%c0_18, %c0_19] : memref<1x128xf32, #tpu.memory_space<vmem>>, vector<1x128xf32>
    %27 = vector.broadcast %26 : vector<1x128xf32> to vector<8x128xf32>
    %28 = arith.addf %25, %27 : vector<8x128xf32>
    %cst_20 = arith.constant 0.000000e+00 : f32
    %29 = vector.broadcast %cst_20 : f32 to vector<8x128xf32>
    %30 = arith.cmpf ogt, %28, %29 : vector<8x128xf32>
    %cst_21 = arith.constant 1.000000e+00 : f32
    %cst_22 = arith.constant -1.000000e+00 : f32
    %31 = vector.broadcast %cst_21 : f32 to vector<8x128xf32>
    %32 = vector.broadcast %cst_22 : f32 to vector<8x128xf32>
    %33 = arith.select %30, %31, %32 : vector<8x128xi1>, vector<8x128xf32>
    %c0_23 = arith.constant 0 : index
    %c0_24 = arith.constant 0 : index
    %c0_25 = arith.constant 0 : index
    %34 = vector.load %arg9[%c0_23, %c0_24, %c0_25] : memref<30x8x128xf32, #tpu.memory_space<vmem>>, vector<30x8x128xf32>
    %35 = vector.shape_cast %33 : vector<8x128xf32> to vector<1x8x128xf32>
    %36 = vector.broadcast %35 : vector<1x8x128xf32> to vector<30x8x128xf32>
    %37 = arith.mulf %34, %36 : vector<30x8x128xf32>
    %38 = vector.shape_cast %37 : vector<30x8x128xf32> to vector<240x128xf32>
    %39 = arith.truncf %38 : vector<240x128xf32> to vector<240x128xbf16>
    %c0_26 = arith.constant 0 : index
    %c0_27 = arith.constant 0 : index
    %40 = vector.load %arg8[%c0_26, %c0_27] : memref<128x128xbf16, #tpu.memory_space<vmem>>, vector<128x128xbf16>
    %cst_28 = arith.constant dense<0.000000e+00> : vector<240x128xf32>
    %41 = tpu.matmul %39, %40, %cst_28 {dimension_numbers = #tpu.dot_dimension_numbers<[1], [0], [0], [1], [0, 0, 1, 1], [], []>} : vector<240x128xbf16>, vector<128x128xbf16>, vector<240x128xf32> -> vector<240x128xf32>
    %cst_29 = arith.constant 0.000000e+00 : f32
    %42 = vector.broadcast %cst_29 : f32 to vector<240x128xf32>
    %43 = arith.cmpf ogt, %41, %42 : vector<240x128xf32>
    %44 = arith.extui %43 : vector<240x128xi1> to vector<240x128xi32>
    %45 = vector.shape_cast %44 : vector<240x128xi32> to vector<30x8x128xi32>
    %cst_30 = arith.constant dense<0> : vector<8x128xi32>
    %46 = vector.multi_reduction <add>, %45, %cst_30 [0] : vector<30x8x128xi32> to vector<8x128xi32>
    %c0_31 = arith.constant 0 : index
    %c0_32 = arith.constant 0 : index
    %47 = vector.load %arg10[%c0_31, %c0_32] : memref<8x128xi32, #tpu.memory_space<vmem>>, vector<8x128xi32>
    tpu.vector_store %arg10[%c0_31, %c0_32], %46 {strides = array<i32>} : memref<8x128xi32, #tpu.memory_space<vmem>>, vector<8x128xi32>,
    return
  }
  func.func @transform_0(%arg0: i32) -> (i32, i32) {
    %c0_i32 = arith.constant 0 : i32
    %c0_i32_0 = arith.constant 0 : i32
    %c0_i32_1 = arith.constant 0 : i32
    return %c0_i32, %c0_i32_0 : i32, i32
  }
  func.func @transform_1(%arg0: i32) -> (i32, i32) {
    %c0_i32 = arith.constant 0 : i32
    %c0_i32_0 = arith.constant 0 : i32
    %c0_i32_1 = arith.constant 0 : i32
    return %c0_i32, %c0_i32_0 : i32, i32
  }
  func.func @transform_2(%arg0: i32) -> (i32, i32) {
    %c0_i32 = arith.constant 0 : i32
    %c0_i32_0 = arith.constant 0 : i32
    %c0_i32_1 = arith.constant 0 : i32
    return %c0_i32, %c0_i32_0 : i32, i32
  }
  func.func @transform_3(%arg0: i32) -> (i32, i32) {
    %c0_i32 = arith.constant 0 : i32
    %c0_i32_0 = arith.constant 0 : i32
    %c0_i32_1 = arith.constant 0 : i32
    return %c0_i32, %c0_i32_0 : i32, i32
  }
  func.func @transform_4(%arg0: i32) -> (i32, i32) {
    %c0_i32 = arith.constant 0 : i32
    %c0_i32_0 = arith.constant 0 : i32
    %c0_i32_1 = arith.constant 0 : i32
    return %c0_i32, %c0_i32_0 : i32, i32
  }
  func.func @transform_5(%arg0: i32) -> (i32, i32) {
    %c0_i32 = arith.constant 0 : i32
    %c0_i32_0 = arith.constant 0 : i32
    %c0_i32_1 = arith.constant 0 : i32
    return %c0_i32, %c0_i32_0 : i32, i32
  }
  func.func @transform_6(%arg0: i32) -> (i32, i32) {
    %c0_i32 = arith.constant 0 : i32
    %c0_i32_0 = arith.constant 0 : i32
    %c0_i32_1 = arith.constant 0 : i32
    return %c0_i32, %c0_i32_0 : i32, i32
  }
  func.func @transform_7(%arg0: i32) -> (i32, i32) {
    %c0_i32 = arith.constant 0 : i32
    %c0_i32_0 = arith.constant 0 : i32
    %c0_i32_1 = arith.constant 0 : i32
    return %c0_i32, %c0_i32_0 : i32, i32
  }
  func.func @transform_8(%arg0: i32) -> (i32, i32, i32) {
    %c0_i32 = arith.constant 0 : i32
    %c0_i32_0 = arith.constant 0 : i32
    %c0_i32_1 = arith.constant 0 : i32
    %c0_i32_2 = arith.constant 0 : i32
    return %c0_i32, %c0_i32_0, %c0_i32_1 : i32, i32, i32
  }
  func.func @transform_9(%arg0: i32) -> (i32, i32) {
    %c0_i32 = arith.constant 0 : i32
    %c0_i32_0 = arith.constant 0 : i32
    %c0_i32_1 = arith.constant 0 : i32
    return %c0_i32, %c0_i32_0 : i32, i32
  }
}

</mosaic_0001>

<llo_original>
// kernel: tpu_custom_call.1
$region0: #{tpu_custom_call.1}
  #allocation0 [shape = 'u32[]', space=smem, size = 0x4, offset = 0x4, fixed_abs, tag = 'smem constant byte address 0x4 - core index']
  #allocation1 [shape = 'u32[144,128]{1,0:T(1,128)}', space=vmem, size = 0x12000, scoped, tag = 'internal scratch']
  %s0 = inlined_call_operand.hbm [shape: f32[8,1024], index: 0, kind: input, shape index: {}]
  %s1 = inlined_call_operand.hbm [shape: bf16[1024,128], index: 1, kind: input, shape index: {}]
  %s2 = inlined_call_operand.vmem [shape: f32[1,128], index: 2, kind: input, shape index: {}]
  %s3 = inlined_call_operand.vmem [shape: f32[1,128], index: 3, kind: input, shape index: {}]
  %s4 = inlined_call_operand.hbm [shape: bf16[128,128], index: 4, kind: input, shape index: {}]
  %s5 = inlined_call_operand.vmem [shape: f32[1,128], index: 5, kind: input, shape index: {}]
  %s6 = inlined_call_operand.vmem [shape: f32[1,128], index: 6, kind: input, shape index: {}]
  %s7 = inlined_call_operand.hbm [shape: bf16[128,128], index: 7, kind: input, shape index: {}]
  %s8 = inlined_call_operand.hbm [shape: f32[30,8,128], index: 8, kind: input, shape index: {}]
  %s9 = inlined_call_operand.hbm [shape: s32[8,128], index: 9, kind: output, shape index: {}]
  %s10 = sld [smem:[#allocation0]]
  $region66: #{tpu_custom_call.1} parent=0
    _
  %s12 = ssub.s32 1, %s10
  %s13 = scalar_select 0, %s12, %s10
  $region1: #{tpu_custom_call.1} parent=0
    #allocation2 [shape = 'u8[32768]{0}', space=vmem, size = 0x8000, scoped, tag = 'input window, operand 0, single buffered']
    #allocation3 [shape = 's32[1]{0}', space=sflag, size = 0x4, scoped, tag = 'scoped memory for tpu_custom_call.1']
    #allocation4 [shape = 's32[1]{0}', space=sflag, size = 0x4, scoped, tag = 'scoped memory for tpu_custom_call.1']
    #allocation5 [shape = 'u8[262144]{0}', space=vmem, size = 0x40000, scoped, tag = 'input window, operand 1, single buffered']
    #allocation6 [shape = 's32[1]{0}', space=sflag, size = 0x4, scoped, tag = 'scoped memory for tpu_custom_call.1']
    #allocation7 [shape = 'u8[32768]{0}', space=vmem, size = 0x8000, scoped, tag = 'input window, operand 4, single buffered']
    #allocation8 [shape = 'u8[32768]{0}', space=vmem, size = 0x8000, scoped, tag = 'input window, operand 7, single buffered']
    #allocation9 [shape = 's32[1]{0}', space=sflag, size = 0x4, scoped, tag = 'scoped memory for tpu_custom_call.1']
    #allocation10 [shape = 'u8[122880]{0}', space=vmem, size = 0x1e000, scoped, tag = 'input window, operand 8, single buffered']
    #allocation11 [shape = 'u8[4096]{0}', space=vmem, size = 0x1000, scoped, tag = 'output window, operand 0, single buffered']
    %14 = vsyncpa [#allocation3], 0
    %15 = vsyncpa [#allocation6], 0
    %16 = vsyncpa [#allocation9], 0
    %17 = vsyncpa [#allocation4], 0
    // Predicated region
    $region2: #{tpu_custom_call.1} parent=1 // pred_check
      _
    $region3: #{tpu_custom_call.1} parent=1 // pred_check_branch
      %19 = sbr.rel (0) target = $region5
    $region4: #{tpu_custom_call.1} parent=1 // pred_region
      %s21 = ssub.s32 1024, 1024
      %22 = vsyncadd [#allocation3], %s21
      %s24 = sshll.u32 [#allocation2], 4
      %s25 = int_to_ptr.vmem [resolvable:$true] %s24
      %27 = dma.hbm_to_vmem [thread:$0]  %s0, 1024, %s25, [#allocation3]
    $region5: #{tpu_custom_call.1} parent=1 // pred_fallthru
      _
    // Predicated region
    $region6: #{tpu_custom_call.1} parent=1 // pred_check
      _
    $region7: #{tpu_custom_call.1} parent=1 // pred_check_branch
      %29 = sbr.rel (0) target = $region9
    $region8: #{tpu_custom_call.1} parent=1 // pred_region
      %s31 = ssub.s32 8192, 8192
      %32 = vsyncadd [#allocation6], %s31
      %s33 = sshll.u32 [#allocation5], 4
      %s34 = int_to_ptr.vmem [resolvable:$true] %s33
      %39 = dma.hbm_to_vmem [thread:$0]  %s1, 8192, %s34, [#allocation6], 64, 64, 4
    $region9: #{tpu_custom_call.1} parent=1 // pred_fallthru
      _
    // Predicated region
    $region10: #{tpu_custom_call.1} parent=1 // pred_check
      _
    $region11: #{tpu_custom_call.1} parent=1 // pred_check_branch
      %41 = sbr.rel (0) target = $region13
    $region12: #{tpu_custom_call.1} parent=1 // pred_region
      _
    $region13: #{tpu_custom_call.1} parent=1 // pred_fallthru
      _
    // Predicated region
    $region14: #{tpu_custom_call.1} parent=1 // pred_check
      _
    $region15: #{tpu_custom_call.1} parent=1 // pred_check_branch
      %43 = sbr.rel (0) target = $region17
    $region16: #{tpu_custom_call.1} parent=1 // pred_region
      _
    $region17: #{tpu_custom_call.1} parent=1 // pred_fallthru
      _
    // Predicated region
    $region18: #{tpu_custom_call.1} parent=1 // pred_check
      _
    $region19: #{tpu_custom_call.1} parent=1 // pred_check_branch
      %45 = sbr.rel (0) target = $region21
    $region20: #{tpu_custom_call.1} parent=1 // pred_region
      %s47 = ssub.s32 1024, 1024
      %48 = vsyncadd [#allocation6], %s47
      %s49 = sshll.u32 [#allocation7], 4
      %s50 = int_to_ptr.vmem [resolvable:$true] %s49
      %55 = dma.hbm_to_vmem [thread:$0]  %s4, 1024, %s50, [#allocation6], 64, 64, 4
    $region21: #{tpu_custom_call.1} parent=1 // pred_fallthru
      _
    // Predicated region
    $region22: #{tpu_custom_call.1} parent=1 // pred_check
      _
    $region23: #{tpu_custom_call.1} parent=1 // pred_check_branch
      %57 = sbr.rel (0) target = $region25
    $region24: #{tpu_custom_call.1} parent=1 // pred_region
      _
    $region25: #{tpu_custom_call.1} parent=1 // pred_fallthru
      _
    // Predicated region
    $region26: #{tpu_custom_call.1} parent=1 // pred_check
      _
    $region27: #{tpu_custom_call.1} parent=1 // pred_check_branch
      %59 = sbr.rel (0) target = $region29
    $region28: #{tpu_custom_call.1} parent=1 // pred_region
      _
    $region29: #{tpu_custom_call.1} parent=1 // pred_fallthru
      _
    // Predicated region
    $region30: #{tpu_custom_call.1} parent=1 // pred_check
      _
    $region31: #{tpu_custom_call.1} parent=1 // pred_check_branch
      %61 = sbr.rel (0) target = $region33
    $region32: #{tpu_custom_call.1} parent=1 // pred_region
      %s63 = ssub.s32 1024, 1024
      %64 = vsyncadd [#allocation9], %s63
      %s65 = sshll.u32 [#allocation8], 4
      %s66 = int_to_ptr.vmem [resolvable:$true] %s65
      %71 = dma.hbm_to_vmem [thread:$0]  %s7, 1024, %s66, [#allocation9], 64, 64, 4
    $region33: #{tpu_custom_call.1} parent=1 // pred_fallthru
      _
    // Predicated region
    $region34: #{tpu_custom_call.1} parent=1 // pred_check
      _
    $region35: #{tpu_custom_call.1} parent=1 // pred_check_branch
      %73 = sbr.rel (0) target = $region37
    $region36: #{tpu_custom_call.1} parent=1 // pred_region
      %s75 = ssub.s32 3840, 3840
      %76 = vsyncadd [#allocation9], %s75
      %s77 = sshll.u32 [#allocation10], 4
      %s78 = int_to_ptr.vmem [resolvable:$true] %s77
      %83 = dma.hbm_to_vmem [thread:$0]  %s8, 3840, %s78, [#allocation9], 128, 128, 8
    $region37: #{tpu_custom_call.1} parent=1 // pred_fallthru
      _
    // Predicated region
    $region38: #{tpu_custom_call.1} parent=1 // pred_check
      _
    $region39: #{tpu_custom_call.1} parent=1 // pred_check_branch
      %85 = sbr.rel (0) target = $region41
    $region40: #{tpu_custom_call.1} parent=1 // pred_region
      %86 = dma.done [#allocation3], 1024
    $region41: #{tpu_custom_call.1} parent=1 // pred_fallthru
      _
    // Predicated region
    $region42: #{tpu_custom_call.1} parent=1 // pred_check
      _
    $region43: #{tpu_custom_call.1} parent=1 // pred_check_branch
      %88 = sbr.rel (0) target = $region45
    $region44: #{tpu_custom_call.1} parent=1 // pred_region
      %89 = dma.done [#allocation6], 8192
    $region45: #{tpu_custom_call.1} parent=1 // pred_fallthru
      _
    // Predicated region
    $region46: #{tpu_custom_call.1} parent=1 // pred_check
      _
    $region47: #{tpu_custom_call.1} parent=1 // pred_check_branch
      %91 = sbr.rel (0) target = $region49
    $region48: #{tpu_custom_call.1} parent=1 // pred_region
      %92 = dma.done [#allocation6], 1024
    $region49: #{tpu_custom_call.1} parent=1 // pred_fallthru
      _
    // Predicated region
    $region50: #{tpu_custom_call.1} parent=1 // pred_check
      _
    $region51: #{tpu_custom_call.1} parent=1 // pred_check_branch
      %94 = sbr.rel (0) target = $region53
    $region52: #{tpu_custom_call.1} parent=1 // pred_region
      %95 = dma.done [#allocation9], 1024
    $region53: #{tpu_custom_call.1} parent=1 // pred_fallthru
      _
    // Predicated region
    $region54: #{tpu_custom_call.1} parent=1 // pred_check
      _
    $region55: #{tpu_custom_call.1} parent=1 // pred_check_branch
      %97 = sbr.rel (0) target = $region57
    $region56: #{tpu_custom_call.1} parent=1 // pred_region
      %98 = dma.done [#allocation9], 3840
    $region57: #{tpu_custom_call.1} parent=1 // pred_fallthru
      _
    %v100 = vld [vmem:[#allocation2] sm:$0xff]
    %v101 = vld [vmem:[#allocation2 + $0x8] sm:$0xff]
    %v102 = vld [vmem:[#allocation2 + $0x10] sm:$0xff]
    %v103 = vld [vmem:[#allocation2 + $0x18] sm:$0xff]
    %v104 = vld [vmem:[#allocation2 + $0x20] sm:$0xff]
    %v105 = vld [vmem:[#allocation2 + $0x28] sm:$0xff]
    %v106 = vld [vmem:[#allocation2 + $0x30] sm:$0xff]
    %v107 = vld [vmem:[#allocation2 + $0x38] sm:$0xff]
    %vm108 = vcmp.gt.f32.partialorder %v100, 0.0
    %vm109 = vcmp.gt.f32.partialorder %v101, 0.0
    %vm110 = vcmp.gt.f32.partialorder %v102, 0.0
    %vm111 = vcmp.gt.f32.partialorder %v103, 0.0
    %vm112 = vcmp.gt.f32.partialorder %v104, 0.0
    %vm113 = vcmp.gt.f32.partialorder %v105, 0.0
    %vm114 = vcmp.gt.f32.partialorder %v106, 0.0
    %vm115 = vcmp.gt.f32.partialorder %v107, 0.0
    %v116 = vsel %vm108, 1.0, -1.0
    %v117 = vsel %vm109, 1.0, -1.0
    %v118 = vsel %vm110, 1.0, -1.0
    %v119 = vsel %vm111, 1.0, -1.0
    %v120 = vsel %vm112, 1.0, -1.0
    %v121 = vsel %vm113, 1.0, -1.0
    %v122 = vsel %vm114, 1.0, -1.0
    %v123 = vsel %vm115, 1.0, -1.0
    %v124 = vpack.c.bf16 %v116, %v116
    %v125 = vpack.c.bf16 %v117, %v117
    %v126 = vpack.c.bf16 %v118, %v118
    %v127 = vpack.c.bf16 %v119, %v119
    %v128 = vpack.c.bf16 %v120, %v120
    %v129 = vpack.c.bf16 %v121, %v121
    %v130 = vpack.c.bf16 %v122, %v122
    %v131 = vpack.c.bf16 %v123, %v123
    %v132 = vld [vmem:[#allocation5] sm:$0xf]
    %v133 = vld [vmem:[#allocation5 + $0x4] sm:$0xf]
    %v134 = vld [vmem:[#allocation5 + $0x8] sm:$0xf]
    %v135 = vld [vmem:[#allocation5 + $0xc] sm:$0xf]
    %v136 = vld [vmem:[#allocation5 + $0x10] sm:$0xf]
    %v137 = vld [vmem:[#allocation5 + $0x14] sm:$0xf]
    %v138 = vld [vmem:[#allocation5 + $0x18] sm:$0xf]
    %v139 = vld [vmem:[#allocation5 + $0x1c] sm:$0xf]
    %v140 = vld [vmem:[#allocation5 + $0x20] sm:$0xf]
    %v141 = vld [vmem:[#allocation5 + $0x24] sm:$0xf]
    %v142 = vld [vmem:[#allocation5 + $0x28] sm:$0xf]
    %v143 = vld [vmem:[#allocation5 + $0x2c] sm:$0xf]
    %v144 = vld [vmem:[#allocation5 + $0x30] sm:$0xf]
    %v145 = vld [vmem:[#allocation5 + $0x34] sm:$0xf]
    %v146 = vld [vmem:[#allocation5 + $0x38] sm:$0xf]
    %v147 = vld [vmem:[#allocation5 + $0x3c] sm:$0xf]
    %v148 = vld [vmem:[#allocation5 + $0x40] sm:$0xf]
    %v149 = vld [vmem:[#allocation5 + $0x44] sm:$0xf]
    %v150 = vld [vmem:[#allocation5 + $0x48] sm:$0xf]
    %v151 = vld [vmem:[#allocation5 + $0x4c] sm:$0xf]
    %v152 = vld [vmem:[#allocation5 + $0x50] sm:$0xf]
    %v153 = vld [vmem:[#allocation5 + $0x54] sm:$0xf]
    %v154 = vld [vmem:[#allocation5 + $0x58] sm:$0xf]
    %v155 = vld [vmem:[#allocation5 + $0x5c] sm:$0xf]
    %v156 = vld [vmem:[#allocation5 + $0x60] sm:$0xf]
    %v157 = vld [vmem:[#allocation5 + $0x64] sm:$0xf]
    %v158 = vld [vmem:[#allocation5 + $0x68] sm:$0xf]
    %v159 = vld [vmem:[#allocation5 + $0x6c] sm:$0xf]
    %v160 = vld [vmem:[#allocation5 + $0x70] sm:$0xf]
    %v161 = vld [vmem:[#allocation5 + $0x74] sm:$0xf]
    %v162 = vld [vmem:[#allocation5 + $0x78] sm:$0xf]
    %v163 = vld [vmem:[#allocation5 + $0x7c] sm:$0xf]
    %v164 = vld [vmem:[#allocation5 + $0x80] sm:$0xf]
    %v165 = vld [vmem:[#allocation5 + $0x84] sm:$0xf]
    %v166 = vld [vmem:[#allocation5 + $0x88] sm:$0xf]
    %v167 = vld [vmem:[#allocation5 + $0x8c] sm:$0xf]
    %v168 = vld [vmem:[#allocation5 + $0x90] sm:$0xf]
    %v169 = vld [vmem:[#allocation5 + $0x94] sm:$0xf]
    %v170 = vld [vmem:[#allocation5 + $0x98] sm:$0xf]
    %v171 = vld [vmem:[#allocation5 + $0x9c] sm:$0xf]
    %v172 = vld [vmem:[#allocation5 + $0xa0] sm:$0xf]
    %v173 = vld [vmem:[#allocation5 + $0xa4] sm:$0xf]
    %v174 = vld [vmem:[#allocation5 + $0xa8] sm:$0xf]
    %v175 = vld [vmem:[#allocation5 + $0xac] sm:$0xf]
    %v176 = vld [vmem:[#allocation5 + $0xb0] sm:$0xf]
    %v177 = vld [vmem:[#allocation5 + $0xb4] sm:$0xf]
    %v178 = vld [vmem:[#allocation5 + $0xb8] sm:$0xf]
    %v179 = vld [vmem:[#allocation5 + $0xbc] sm:$0xf]
    %v180 = vld [vmem:[#allocation5 + $0xc0] sm:$0xf]
    %v181 = vld [vmem:[#allocation5 + $0xc4] sm:$0xf]
    %v182 = vld [vmem:[#allocation5 + $0xc8] sm:$0xf]
    %v183 = vld [vmem:[#allocation5 + $0xcc] sm:$0xf]
    %v184 = vld [vmem:[#allocation5 + $0xd0] sm:$0xf]
    %v185 = vld [vmem:[#allocation5 + $0xd4] sm:$0xf]
    %v186 = vld [vmem:[#allocation5 + $0xd8] sm:$0xf]
    %v187 = vld [vmem:[#allocation5 + $0xdc] sm:$0xf]
    %v188 = vld [vmem:[#allocation5 + $0xe0] sm:$0xf]
    %v189 = vld [vmem:[#allocation5 + $0xe4] sm:$0xf]
    %v190 = vld [vmem:[#allocation5 + $0xe8] sm:$0xf]
    %v191 = vld [vmem:[#allocation5 + $0xec] sm:$0xf]
    %v192 = vld [vmem:[#allocation5 + $0xf0] sm:$0xf]
    %v193 = vld [vmem:[#allocation5 + $0xf4] sm:$0xf]
    %v194 = vld [vmem:[#allocation5 + $0xf8] sm:$0xf]
    %v195 = vld [vmem:[#allocation5 + $0xfc] sm:$0xf]
    %v196 = vld [vmem:[#allocation5 + $0x100] sm:$0xf]
    %v197 = vld [vmem:[#allocation5 + $0x104] sm:$0xf]
    %v198 = vld [vmem:[#allocation5 + $0x108] sm:$0xf]
    %v199 = vld [vmem:[#allocation5 + $0x10c] sm:$0xf]
    %v200 = vld [vmem:[#allocation5 + $0x110] sm:$0xf]
    %v201 = vld [vmem:[#allocation5 + $0x114] sm:$0xf]
    %v202 = vld [vmem:[#allocation5 + $0x118] sm:$0xf]
    %v203 = vld [vmem:[#allocation5 + $0x11c] sm:$0xf]
    %v204 = vld [vmem:[#allocation5 + $0x120] sm:$0xf]
    %v205 = vld [vmem:[#allocation5 + $0x124] sm:$0xf]
    %v206 = vld [vmem:[#allocation5 + $0x128] sm:$0xf]
    %v207 = vld [vmem:[#allocation5 + $0x12c] sm:$0xf]
    %v208 = vld [vmem:[#allocation5 + $0x130] sm:$0xf]
    %v209 = vld [vmem:[#allocation5 + $0x134] sm:$0xf]
    %v210 = vld [vmem:[#allocation5 + $0x138] sm:$0xf]
    %v211 = vld [vmem:[#allocation5 + $0x13c] sm:$0xf]
    %v212 = vld [vmem:[#allocation5 + $0x140] sm:$0xf]
    %v213 = vld [vmem:[#allocation5 + $0x144] sm:$0xf]
    %v214 = vld [vmem:[#allocation5 + $0x148] sm:$0xf]
    %v215 = vld [vmem:[#allocation5 + $0x14c] sm:$0xf]
    %v216 = vld [vmem:[#allocation5 + $0x150] sm:$0xf]
    %v217 = vld [vmem:[#allocation5 + $0x154] sm:$0xf]
    %v218 = vld [vmem:[#allocation5 + $0x158] sm:$0xf]
    %v219 = vld [vmem:[#allocation5 + $0x15c] sm:$0xf]
    %v220 = vld [vmem:[#allocation5 + $0x160] sm:$0xf]
    %v221 = vld [vmem:[#allocation5 + $0x164] sm:$0xf]
    %v222 = vld [vmem:[#allocation5 + $0x168] sm:$0xf]
    %v223 = vld [vmem:[#allocation5 + $0x16c] sm:$0xf]
    %v224 = vld [vmem:[#allocation5 + $0x170] sm:$0xf]
    %v225 = vld [vmem:[#allocation5 + $0x174] sm:$0xf]
    %v226 = vld [vmem:[#allocation5 + $0x178] sm:$0xf]
    %v227 = vld [vmem:[#allocation5 + $0x17c] sm:$0xf]
    %v228 = vld [vmem:[#allocation5 + $0x180] sm:$0xf]
    %v229 = vld [vmem:[#allocation5 + $0x184] sm:$0xf]
    %v230 = vld [vmem:[#allocation5 + $0x188] sm:$0xf]
    %v231 = vld [vmem:[#allocation5 + $0x18c] sm:$0xf]
    %v232 = vld [vmem:[#allocation5 + $0x190] sm:$0xf]
    %v233 = vld [vmem:[#allocation5 + $0x194] sm:$0xf]
    %v234 = vld [vmem:[#allocation5 + $0x198] sm:$0xf]
    %v235 = vld [vmem:[#allocation5 + $0x19c] sm:$0xf]
    %v236 = vld [vmem:[#allocation5 + $0x1a0] sm:$0xf]
    %v237 = vld [vmem:[#allocation5 + $0x1a4] sm:$0xf]
    %v238 = vld [vmem:[#allocation5 + $0x1a8] sm:$0xf]
    %v239 = vld [vmem:[#allocation5 + $0x1ac] sm:$0xf]
    %v240 = vld [vmem:[#allocation5 + $0x1b0] sm:$0xf]
    %v241 = vld [vmem:[#allocation5 + $0x1b4] sm:$0xf]
    %v242 = vld [vmem:[#allocation5 + $0x1b8] sm:$0xf]
    %v243 = vld [vmem:[#allocation5 + $0x1bc] sm:$0xf]
    %v244 = vld [vmem:[#allocation5 + $0x1c0] sm:$0xf]
    %v245 = vld [vmem:[#allocation5 + $0x1c4] sm:$0xf]
    %v246 = vld [vmem:[#allocation5 + $0x1c8] sm:$0xf]
    %v247 = vld [vmem:[#allocation5 + $0x1cc] sm:$0xf]
    %v248 = vld [vmem:[#allocation5 + $0x1d0] sm:$0xf]
    %v249 = vld [vmem:[#allocation5 + $0x1d4] sm:$0xf]
    %v250 = vld [vmem:[#allocation5 + $0x1d8] sm:$0xf]
    %v251 = vld [vmem:[#allocation5 + $0x1dc] sm:$0xf]
    %v252 = vld [vmem:[#allocation5 + $0x1e0] sm:$0xf]
    %v253 = vld [vmem:[#allocation5 + $0x1e4] sm:$0xf]
    %v254 = vld [vmem:[#allocation5 + $0x1e8] sm:$0xf]
    %v255 = vld [vmem:[#allocation5 + $0x1ec] sm:$0xf]
    %v256 = vld [vmem:[#allocation5 + $0x1f0] sm:$0xf]
    %v257 = vld [vmem:[#allocation5 + $0x1f4] sm:$0xf]
    %v258 = vld [vmem:[#allocation5 + $0x1f8] sm:$0xf]
    %v259 = vld [vmem:[#allocation5 + $0x1fc] sm:$0xf]
    %v388 = vunpack.c.l.b16 %v132
    %v389 = vunpack.c.l.b16 %v133
    %v390 = vunpack.c.l.b16 %v134
    %v391 = vunpack.c.l.b16 %v135
    %v392 = vunpack.c.l.b16 %v136
    %v393 = vunpack.c.l.b16 %v137
    %v394 = vunpack.c.l.b16 %v138
    %v395 = vunpack.c.l.b16 %v139
    %v396 = vunpack.c.l.b16 %v140
    %v397 = vunpack.c.l.b16 %v141
    %v398 = vunpack.c.l.b16 %v142
    %v399 = vunpack.c.l.b16 %v143
    %v400 = vunpack.c.l.b16 %v144
    %v401 = vunpack.c.l.b16 %v145
    %v402 = vunpack.c.l.b16 %v146
    %v403 = vunpack.c.l.b16 %v147
    %v404 = vunpack.c.l.b16 %v148
    %v405 = vunpack.c.l.b16 %v149
    %v406 = vunpack.c.l.b16 %v150
    %v407 = vunpack.c.l.b16 %v151
    %v408 = vunpack.c.l.b16 %v152
    %v409 = vunpack.c.l.b16 %v153
    %v410 = vunpack.c.l.b16 %v154
    %v411 = vunpack.c.l.b16 %v155
    %v412 = vunpack.c.l.b16 %v156
    %v413 = vunpack.c.l.b16 %v157
    %v414 = vunpack.c.l.b16 %v158
    %v415 = vunpack.c.l.b16 %v159
    %v416 = vunpack.c.l.b16 %v160
    %v417 = vunpack.c.l.b16 %v161
    %v418 = vunpack.c.l.b16 %v162
    %v419 = vunpack.c.l.b16 %v163
    %v420 = vunpack.c.l.b16 %v164
    %v421 = vunpack.c.l.b16 %v165
    %v422 = vunpack.c.l.b16 %v166
    %v423 = vunpack.c.l.b16 %v167
    %v424 = vunpack.c.l.b16 %v168
    %v425 = vunpack.c.l.b16 %v169
    %v426 = vunpack.c.l.b16 %v170
    %v427 = vunpack.c.l.b16 %v171
    %v428 = vunpack.c.l.b16 %v172
    %v429 = vunpack.c.l.b16 %v173
    %v430 = vunpack.c.l.b16 %v174
    %v431 = vunpack.c.l.b16 %v175
    %v432 = vunpack.c.l.b16 %v176
    %v433 = vunpack.c.l.b16 %v177
    %v434 = vunpack.c.l.b16 %v178
    %v435 = vunpack.c.l.b16 %v179
    %v436 = vunpack.c.l.b16 %v180
    %v437 = vunpack.c.l.b16 %v181
    %v438 = vunpack.c.l.b16 %v182
    %v439 = vunpack.c.l.b16 %v183
    %v440 = vunpack.c.l.b16 %v184
    %v441 = vunpack.c.l.b16 %v185
    %v442 = vunpack.c.l.b16 %v186
    %v443 = vunpack.c.l.b16 %v187
    %v444 = vunpack.c.l.b16 %v188
    %v445 = vunpack.c.l.b16 %v189
    %v446 = vunpack.c.l.b16 %v190
    %v447 = vunpack.c.l.b16 %v191
    %v448 = vunpack.c.l.b16 %v192
    %v449 = vunpack.c.l.b16 %v193
    %v450 = vunpack.c.l.b16 %v194
    %v451 = vunpack.c.l.b16 %v195
    %v452 = vunpack.c.l.b16 %v196
    %v453 = vunpack.c.l.b16 %v197
    %v454 = vunpack.c.l.b16 %v198
    %v455 = vunpack.c.l.b16 %v199
    %v456 = vunpack.c.l.b16 %v200
    %v457 = vunpack.c.l.b16 %v201
    %v458 = vunpack.c.l.b16 %v202
    %v459 = vunpack.c.l.b16 %v203
    %v460 = vunpack.c.l.b16 %v204
    %v461 = vunpack.c.l.b16 %v205
    %v462 = vunpack.c.l.b16 %v206
    %v463 = vunpack.c.l.b16 %v207
    %v464 = vunpack.c.l.b16 %v208
    %v465 = vunpack.c.l.b16 %v209
    %v466 = vunpack.c.l.b16 %v210
    %v467 = vunpack.c.l.b16 %v211
    %v468 = vunpack.c.l.b16 %v212
    %v469 = vunpack.c.l.b16 %v213
    %v470 = vunpack.c.l.b16 %v214
    %v471 = vunpack.c.l.b16 %v215
    %v472 = vunpack.c.l.b16 %v216
    %v473 = vunpack.c.l.b16 %v217
    %v474 = vunpack.c.l.b16 %v218
    %v475 = vunpack.c.l.b16 %v219
    %v476 = vunpack.c.l.b16 %v220
    %v477 = vunpack.c.l.b16 %v221
    %v478 = vunpack.c.l.b16 %v222
    %v479 = vunpack.c.l.b16 %v223
    %v480 = vunpack.c.l.b16 %v224
    %v481 = vunpack.c.l.b16 %v225
    %v482 = vunpack.c.l.b16 %v226
    %v483 = vunpack.c.l.b16 %v227
    %v484 = vunpack.c.l.b16 %v228
    %v485 = vunpack.c.l.b16 %v229
    %v486 = vunpack.c.l.b16 %v230
    %v487 = vunpack.c.l.b16 %v231
    %v488 = vunpack.c.l.b16 %v232
    %v489 = vunpack.c.l.b16 %v233
    %v490 = vunpack.c.l.b16 %v234
    %v491 = vunpack.c.l.b16 %v235
    %v492 = vunpack.c.l.b16 %v236
    %v493 = vunpack.c.l.b16 %v237
    %v494 = vunpack.c.l.b16 %v238
    %v495 = vunpack.c.l.b16 %v239
    %v496 = vunpack.c.l.b16 %v240
    %v497 = vunpack.c.l.b16 %v241
    %v498 = vunpack.c.l.b16 %v242
    %v499 = vunpack.c.l.b16 %v243
    %v500 = vunpack.c.l.b16 %v244
    %v501 = vunpack.c.l.b16 %v245
    %v502 = vunpack.c.l.b16 %v246
    %v503 = vunpack.c.l.b16 %v247
    %v504 = vunpack.c.l.b16 %v248
    %v505 = vunpack.c.l.b16 %v249
    %v506 = vunpack.c.l.b16 %v250
    %v507 = vunpack.c.l.b16 %v251
    %v508 = vunpack.c.l.b16 %v252
    %v509 = vunpack.c.l.b16 %v253
    %v510 = vunpack.c.l.b16 %v254
    %v511 = vunpack.c.l.b16 %v255
    %v512 = vunpack.c.l.b16 %v256
    %v513 = vunpack.c.l.b16 %v257
    %v514 = vunpack.c.l.b16 %v258
    %v515 = vunpack.c.l.b16 %v259
    %v516 = vpack.c.b16 %v389, %v388
    %v517 = vpack.c.b16 %v391, %v390
    %v518 = vpack.c.b16 %v393, %v392
    %v519 = vpack.c.b16 %v395, %v394
    %v520 = vpack.c.b16 %v397, %v396
    %v521 = vpack.c.b16 %v399, %v398
    %v522 = vpack.c.b16 %v401, %v400
    %v523 = vpack.c.b16 %v403, %v402
    %v524 = vpack.c.b16 %v405, %v404
    %v525 = vpack.c.b16 %v407, %v406
    %v526 = vpack.c.b16 %v409, %v408
    %v527 = vpack.c.b16 %v411, %v410
    %v528 = vpack.c.b16 %v413, %v412
    %v529 = vpack.c.b16 %v415, %v414
    %v530 = vpack.c.b16 %v417, %v416
    %v531 = vpack.c.b16 %v419, %v418
    %v532 = vpack.c.b16 %v421, %v420
    %v533 = vpack.c.b16 %v423, %v422
    %v534 = vpack.c.b16 %v425, %v424
    %v535 = vpack.c.b16 %v427, %v426
    %v536 = vpack.c.b16 %v429, %v428
    %v537 = vpack.c.b16 %v431, %v430
    %v538 = vpack.c.b16 %v433, %v432
    %v539 = vpack.c.b16 %v435, %v434
    %v540 = vpack.c.b16 %v437, %v436
    %v541 = vpack.c.b16 %v439, %v438
    %v542 = vpack.c.b16 %v441, %v440
    %v543 = vpack.c.b16 %v443, %v442
    %v544 = vpack.c.b16 %v445, %v444
    %v545 = vpack.c.b16 %v447, %v446
    %v546 = vpack.c.b16 %v449, %v448
    %v547 = vpack.c.b16 %v451, %v450
    %v548 = vpack.c.b16 %v453, %v452
    %v549 = vpack.c.b16 %v455, %v454
    %v550 = vpack.c.b16 %v457, %v456
    %v551 = vpack.c.b16 %v459, %v458
    %v552 = vpack.c.b16 %v461, %v460
    %v553 = vpack.c.b16 %v463, %v462
    %v554 = vpack.c.b16 %v465, %v464
    %v555 = vpack.c.b16 %v467, %v466
    %v556 = vpack.c.b16 %v469, %v468
    %v557 = vpack.c.b16 %v471, %v470
    %v558 = vpack.c.b16 %v473, %v472
    %v559 = vpack.c.b16 %v475, %v474
    %v560 = vpack.c.b16 %v477, %v476
    %v561 = vpack.c.b16 %v479, %v478
    %v562 = vpack.c.b16 %v481, %v480
    %v563 = vpack.c.b16 %v483, %v482
    %v564 = vpack.c.b16 %v485, %v484
    %v565 = vpack.c.b16 %v487, %v486
    %v566 = vpack.c.b16 %v489, %v488
    %v567 = vpack.c.b16 %v491, %v490
    %v568 = vpack.c.b16 %v493, %v492
    %v569 = vpack.c.b16 %v495, %v494
    %v570 = vpack.c.b16 %v497, %v496
    %v571 = vpack.c.b16 %v499, %v498
    %v572 = vpack.c.b16 %v501, %v500
    %v573 = vpack.c.b16 %v503, %v502
    %v574 = vpack.c.b16 %v505, %v504
    %v575 = vpack.c.b16 %v507, %v506
    %v576 = vpack.c.b16 %v509, %v508
    %v577 = vpack.c.b16 %v511, %v510
    %v578 = vpack.c.b16 %v513, %v512
    %v579 = vpack.c.b16 %v515, %v514
    %644 = vmatprep.subr.bf16.mxu0 0
    %645 = vmatpush1.bf16.msra.mxu0 %v523
    %646 = vmatprep.subr.bf16.mxu0 0
    %647 = vmatpush1.bf16.msra.mxu0 %v522
    %648 = vmatprep.subr.bf16.mxu0 0
    %649 = vmatpush1.bf16.msra.mxu0 %v521
    %650 = vmatprep.subr.bf16.mxu0 0
    %651 = vmatpush1.bf16.msra.mxu0 %v520
    %652 = vmatprep.subr.bf16.mxu0 0
    %653 = vmatpush1.bf16.msra.mxu0 %v519
    %654 = vmatprep.subr.bf16.mxu0 0
    %655 = vmatpush1.bf16.msra.mxu0 %v518
    %656 = vmatprep.subr.bf16.mxu0 0
    %657 = vmatpush1.bf16.msra.mxu0 %v517
    %658 = vmatprep.subr.bf16.mxu0 0
    %659 = vmatpush1.bf16.msra.mxu0 %v516
    %660 = vmatprep.subr.bf16.mxu0 0
    %661 = vmatpush2.bf16.msra.mxu0 %v531
    %662 = vmatprep.subr.bf16.mxu0 0
    %663 = vmatpush2.bf16.msra.mxu0 %v530
    %664 = vmatprep.subr.bf16.mxu0 0
    %665 = vmatpush2.bf16.msra.mxu0 %v529
    %666 = vmatprep.subr.bf16.mxu0 0
    %667 = vmatpush2.bf16.msra.mxu0 %v528
    %668 = vmatprep.subr.bf16.mxu0 0
    %669 = vmatpush2.bf16.msra.mxu0 %v527
    %670 = vmatprep.subr.bf16.mxu0 0
    %671 = vmatpush2.bf16.msra.mxu0 %v526
    %672 = vmatprep.subr.bf16.mxu0 0
    %673 = vmatpush2.bf16.msra.mxu0 %v525
    %674 = vmatprep.subr.bf16.mxu0 0
    %675 = vmatpush2.bf16.msra.mxu0 %v524
    %676 = vmatprep.mubr.bf16.mxu0 %v125
    %677 = vmatmul.mubr.bf16.gmra.mxu0 %v124
    %v678 = vpop.f32.mrf.mxu0
    %v679 = vadd.f32 0.0, %v678
    %v680 = vpop.f32.mrf.mxu0
    %v681 = vpop.f32.mrf.mxu0
    %v682 = vpop.f32.mrf.mxu0
    %683 = vdwg.mxu0
    %684 = vmatprep.subr.bf16.mxu0 0
    %685 = vmatpush1.bf16.msra.mxu0 %v539
    %686 = vmatprep.subr.bf16.mxu0 0
    %687 = vmatpush1.bf16.msra.mxu0 %v538
    %688 = vmatprep.subr.bf16.mxu0 0
    %689 = vmatpush1.bf16.msra.mxu0 %v537
    %690 = vmatprep.subr.bf16.mxu0 0
    %691 = vmatpush1.bf16.msra.mxu0 %v536
    %692 = vmatprep.subr.bf16.mxu0 0
    %693 = vmatpush1.bf16.msra.mxu0 %v535
    %694 = vmatprep.subr.bf16.mxu0 0
    %695 = vmatpush1.bf16.msra.mxu0 %v534
    %696 = vmatprep.subr.bf16.mxu0 0
    %697 = vmatpush1.bf16.msra.mxu0 %v533
    %698 = vmatprep.subr.bf16.mxu0 0
    %699 = vmatpush1.bf16.msra.mxu0 %v532
    %700 = vmatprep.subr.bf16.mxu0 0
    %701 = vmatpush2.bf16.msra.mxu0 %v547
    %702 = vmatprep.subr.bf16.mxu0 0
    %703 = vmatpush2.bf16.msra.mxu0 %v546
    %704 = vmatprep.subr.bf16.mxu0 0
    %705 = vmatpush2.bf16.msra.mxu0 %v545
    %706 = vmatprep.subr.bf16.mxu0 0
    %707 = vmatpush2.bf16.msra.mxu0 %v544
    %708 = vmatprep.subr.bf16.mxu0 0
    %709 = vmatpush2.bf16.msra.mxu0 %v543
    %710 = vmatprep.subr.bf16.mxu0 0
    %711 = vmatpush2.bf16.msra.mxu0 %v542
    %712 = vmatprep.subr.bf16.mxu0 0
    %713 = vmatpush2.bf16.msra.mxu0 %v541
    %714 = vmatprep.subr.bf16.mxu0 0
    %715 = vmatpush2.bf16.msra.mxu0 %v540
    %716 = vmatprep.mubr.bf16.mxu0 %v127
    %717 = vmatmul.mubr.bf16.gmra.mxu0 %v126
    %v718 = vpop.f32.mrf.mxu0
    %v719 = vadd.f32 %v679, %v718
    %v720 = vpop.f32.mrf.mxu0
    %v721 = vpop.f32.mrf.mxu0
    %v722 = vpop.f32.mrf.mxu0
    %723 = vdwg.mxu0
    %724 = vmatprep.subr.bf16.mxu0 0
    %725 = vmatpush1.bf16.msra.mxu0 %v555
    %726 = vmatprep.subr.bf16.mxu0 0
    %727 = vmatpush1.bf16.msra.mxu0 %v554
    %728 = vmatprep.subr.bf16.mxu0 0
    %729 = vmatpush1.bf16.msra.mxu0 %v553
    %730 = vmatprep.subr.bf16.mxu0 0
    %731 = vmatpush1.bf16.msra.mxu0 %v552
    %732 = vmatprep.subr.bf16.mxu0 0
    %733 = vmatpush1.bf16.msra.mxu0 %v551
    %734 = vmatprep.subr.bf16.mxu0 0
    %735 = vmatpush1.bf16.msra.mxu0 %v550
    %736 = vmatprep.subr.bf16.mxu0 0
    %737 = vmatpush1.bf16.msra.mxu0 %v549
    %738 = vmatprep.subr.bf16.mxu0 0
    %739 = vmatpush1.bf16.msra.mxu0 %v548
    %740 = vmatprep.subr.bf16.mxu0 0
    %741 = vmatpush2.bf16.msra.mxu0 %v563
    %742 = vmatprep.subr.bf16.mxu0 0
    %743 = vmatpush2.bf16.msra.mxu0 %v562
    %744 = vmatprep.subr.bf16.mxu0 0
    %745 = vmatpush2.bf16.msra.mxu0 %v561
    %746 = vmatprep.subr.bf16.mxu0 0
    %747 = vmatpush2.bf16.msra.mxu0 %v560
    %748 = vmatprep.subr.bf16.mxu0 0
    %749 = vmatpush2.bf16.msra.mxu0 %v559
    %750 = vmatprep.subr.bf16.mxu0 0
    %751 = vmatpush2.bf16.msra.mxu0 %v558
    %752 = vmatprep.subr.bf16.mxu0 0
    %753 = vmatpush2.bf16.msra.mxu0 %v557
    %754 = vmatprep.subr.bf16.mxu0 0
    %755 = vmatpush2.bf16.msra.mxu0 %v556
    %756 = vmatprep.mubr.bf16.mxu0 %v129
    %757 = vmatmul.mubr.bf16.gmra.mxu0 %v128
    %v758 = vpop.f32.mrf.mxu0
    %v759 = vadd.f32 %v719, %v758
    %v760 = vpop.f32.mrf.mxu0
    %v761 = vpop.f32.mrf.mxu0
    %v762 = vpop.f32.mrf.mxu0
    %763 = vdwg.mxu0
    %764 = vmatprep.subr.bf16.mxu0 0
    %765 = vmatpush1.bf16.msra.mxu0 %v571
    %766 = vmatprep.subr.bf16.mxu0 0
    %767 = vmatpush1.bf16.msra.mxu0 %v570
    %768 = vmatprep.subr.bf16.mxu0 0
    %769 = vmatpush1.bf16.msra.mxu0 %v569
    %770 = vmatprep.subr.bf16.mxu0 0
    %771 = vmatpush1.bf16.msra.mxu0 %v568
    %772 = vmatprep.subr.bf16.mxu0 0
    %773 = vmatpush1.bf16.msra.mxu0 %v567
    %774 = vmatprep.subr.bf16.mxu0 0
    %775 = vmatpush1.bf16.msra.mxu0 %v566
    %776 = vmatprep.subr.bf16.mxu0 0
    %777 = vmatpush1.bf16.msra.mxu0 %v565
    %778 = vmatprep.subr.bf16.mxu0 0
    %779 = vmatpush1.bf16.msra.mxu0 %v564
    %780 = vmatprep.subr.bf16.mxu0 0
    %781 = vmatpush2.bf16.msra.mxu0 %v579
    %782 = vmatprep.subr.bf16.mxu0 0
    %783 = vmatpush2.bf16.msra.mxu0 %v578
    %784 = vmatprep.subr.bf16.mxu0 0
    %785 = vmatpush2.bf16.msra.mxu0 %v577
    %786 = vmatprep.subr.bf16.mxu0 0
    %787 = vmatpush2.bf16.msra.mxu0 %v576
    %788 = vmatprep.subr.bf16.mxu0 0
    %789 = vmatpush2.bf16.msra.mxu0 %v575
    %790 = vmatprep.subr.bf16.mxu0 0
    %791 = vmatpush2.bf16.msra.mxu0 %v574
    %792 = vmatprep.subr.bf16.mxu0 0
    %793 = vmatpush2.bf16.msra.mxu0 %v573
    %794 = vmatprep.subr.bf16.mxu0 0
    %795 = vmatpush2.bf16.msra.mxu0 %v572
    %796 = vmatprep.mubr.bf16.mxu0 %v131
    %797 = vmatmul.mubr.bf16.gmra.mxu0 %v130
    %v798 = vpop.f32.mrf.mxu0
    %v799 = vadd.f32 %v759, %v798
    %v800 = vpop.f32.mrf.mxu0
    %v801 = vpop.f32.mrf.mxu0
    %v802 = vpop.f32.mrf.mxu0
    %803 = vdwg.mxu0
    %v804 = vld [vmem:[%s2] sm:$0x1]
    %v806 = vlaneseq
    %v807 = vshrl.u32 %v806, 7
    %v808 = vsub.s32 0, %v807
    %v809 = vrot.slane %v804, %v808
    %v811 = vmul.f32 %v799, %v809
    %v812 = vld [vmem:[%s3] sm:$0x1]
    %v814 = vlaneseq
    %v815 = vshrl.u32 %v814, 7
    %v816 = vsub.s32 0, %v815
    %v817 = vrot.slane %v812, %v816
    %v819 = vadd.f32 %v811, %v817
    %vm820 = vcmp.gt.f32.partialorder %v819, 0.0
    %v821 = vsel %vm820, 1.0, -1.0
    %v822 = vpack.c.bf16 %v821, %v821
    %v823 = vld [vmem:[#allocation7] sm:$0xf]
    %v824 = vld [vmem:[#allocation7 + $0x4] sm:$0xf]
    %v825 = vld [vmem:[#allocation7 + $0x8] sm:$0xf]
    %v826 = vld [vmem:[#allocation7 + $0xc] sm:$0xf]
    %v827 = vld [vmem:[#allocation7 + $0x10] sm:$0xf]
    %v828 = vld [vmem:[#allocation7 + $0x14] sm:$0xf]
    %v829 = vld [vmem:[#allocation7 + $0x18] sm:$0xf]
    %v830 = vld [vmem:[#allocation7 + $0x1c] sm:$0xf]
    %v831 = vld [vmem:[#allocation7 + $0x20] sm:$0xf]
    %v832 = vld [vmem:[#allocation7 + $0x24] sm:$0xf]
    %v833 = vld [vmem:[#allocation7 + $0x28] sm:$0xf]
    %v834 = vld [vmem:[#allocation7 + $0x2c] sm:$0xf]
    %v835 = vld [vmem:[#allocation7 + $0x30] sm:$0xf]
    %v836 = vld [vmem:[#allocation7 + $0x34] sm:$0xf]
    %v837 = vld [vmem:[#allocation7 + $0x38] sm:$0xf]
    %v838 = vld [vmem:[#allocation7 + $0x3c] sm:$0xf]
    %v855 = vunpack.c.l.b16 %v823
    %v856 = vunpack.c.l.b16 %v824
    %v857 = vunpack.c.l.b16 %v825
    %v858 = vunpack.c.l.b16 %v826
    %v859 = vunpack.c.l.b16 %v827
    %v860 = vunpack.c.l.b16 %v828
    %v861 = vunpack.c.l.b16 %v829
    %v862 = vunpack.c.l.b16 %v830
    %v863 = vunpack.c.l.b16 %v831
    %v864 = vunpack.c.l.b16 %v832
    %v865 = vunpack.c.l.b16 %v833
    %v866 = vunpack.c.l.b16 %v834
    %v867 = vunpack.c.l.b16 %v835
    %v868 = vunpack.c.l.b16 %v836
    %v869 = vunpack.c.l.b16 %v837
    %v870 = vunpack.c.l.b16 %v838
    %v871 = vpack.c.b16 %v856, %v855
    %v872 = vpack.c.b16 %v858, %v857
    %v873 = vpack.c.b16 %v860, %v859
    %v874 = vpack.c.b16 %v862, %v861
    %v875 = vpack.c.b16 %v864, %v863
    %v876 = vpack.c.b16 %v866, %v865
    %v877 = vpack.c.b16 %v868, %v867
    %v878 = vpack.c.b16 %v870, %v869
    %887 = vmatprep.subr.bf16.mxu0 0
    %888 = vmatpush1.bf16.msra.mxu0 %v878
    %889 = vmatprep.subr.bf16.mxu0 0
    %890 = vmatpush1.bf16.msra.mxu0 %v877
    %891 = vmatprep.subr.bf16.mxu0 0
    %892 = vmatpush1.bf16.msra.mxu0 %v876
    %893 = vmatprep.subr.bf16.mxu0 0
    %894 = vmatpush1.bf16.msra.mxu0 %v875
    %895 = vmatprep.subr.bf16.mxu0 0
    %896 = vmatpush1.bf16.msra.mxu0 %v874
    %897 = vmatprep.subr.bf16.mxu0 0
    %898 = vmatpush1.bf16.msra.mxu0 %v873
    %899 = vmatprep.subr.bf16.mxu0 0
    %900 = vmatpush1.bf16.msra.mxu0 %v872
    %901 = vmatprep.subr.bf16.mxu0 0
    %902 = vmatpush1.bf16.msra.mxu0 %v871
    %903 = vmatprep.subr.bf16.mxu0 0
    %904 = vmatpush2.bf16.msra.mxu0 0
    %905 = vmatprep.subr.bf16.mxu0 0
    %906 = vmatpush2.bf16.msra.mxu0 0
    %907 = vmatprep.subr.bf16.mxu0 0
    %908 = vmatpush2.bf16.msra.mxu0 0
    %909 = vmatprep.subr.bf16.mxu0 0
    %910 = vmatpush2.bf16.msra.mxu0 0
    %911 = vmatprep.subr.bf16.mxu0 0
    %912 = vmatpush2.bf16.msra.mxu0 0
    %913 = vmatprep.subr.bf16.mxu0 0
    %914 = vmatpush2.bf16.msra.mxu0 0
    %915 = vmatprep.subr.bf16.mxu0 0
    %916 = vmatpush2.bf16.msra.mxu0 0
    %917 = vmatprep.subr.bf16.mxu0 0
    %918 = vmatpush2.bf16.msra.mxu0 0
    %919 = vmatprep.mubr.bf16.mxu0 0
    %920 = vmatmul.mubr.bf16.gmra.mxu0 %v822
    %v921 = vpop.f32.mrf.mxu0
    %v922 = vadd.f32 0.0, %v921
    %v923 = vpop.f32.mrf.mxu0
    %v924 = vpop.f32.mrf.mxu0
    %v925 = vpop.f32.mrf.mxu0
    %926 = vdwg.mxu0
    %v927 = vld [vmem:[%s5] sm:$0x1]
    %v929 = vlaneseq
    %v930 = vshrl.u32 %v929, 7
    %v931 = vsub.s32 0, %v930
    %v932 = vrot.slane %v927, %v931
    %v934 = vmul.f32 %v922, %v932
    %v935 = vld [vmem:[%s6] sm:$0x1]
    %v937 = vlaneseq
    %v938 = vshrl.u32 %v937, 7
    %v939 = vsub.s32 0, %v938
    %v940 = vrot.slane %v935, %v939
    %v942 = vadd.f32 %v934, %v940
    %vm943 = vcmp.gt.f32.partialorder %v942, 0.0
    %v944 = vsel %vm943, 1.0, -1.0
    %v945 = vld [vmem:[#allocation10] sm:$0xff]
    %v946 = vld [vmem:[#allocation10 + $0x8] sm:$0xff]
    %v947 = vld [vmem:[#allocation10 + $0x10] sm:$0xff]
    %v948 = vld [vmem:[#allocation10 + $0x18] sm:$0xff]
    %v949 = vld [vmem:[#allocation10 + $0x20] sm:$0xff]
    %v950 = vld [vmem:[#allocation10 + $0x28] sm:$0xff]
    %v951 = vld [vmem:[#allocation10 + $0x30] sm:$0xff]
    %v952 = vld [vmem:[#allocation10 + $0x38] sm:$0xff]
    %v953 = vld [vmem:[#allocation10 + $0x40] sm:$0xff]
    %v954 = vld [vmem:[#allocation10 + $0x48] sm:$0xff]
    %v955 = vld [vmem:[#allocation10 + $0x50] sm:$0xff]
    %v956 = vld [vmem:[#allocation10 + $0x58] sm:$0xff]
    %v957 = vld [vmem:[#allocation10 + $0x60] sm:$0xff]
    %v958 = vld [vmem:[#allocation10 + $0x68] sm:$0xff]
    %v959 = vld [vmem:[#allocation10 + $0x70] sm:$0xff]
    %v960 = vld [vmem:[#allocation10 + $0x78] sm:$0xff]
    %v961 = vld [vmem:[#allocation10 + $0x80] sm:$0xff]
    %v962 = vld [vmem:[#allocation10 + $0x88] sm:$0xff]
    %v963 = vld [vmem:[#allocation10 + $0x90] sm:$0xff]
    %v964 = vld [vmem:[#allocation10 + $0x98] sm:$0xff]
    %v965 = vld [vmem:[#allocation10 + $0xa0] sm:$0xff]
    %v966 = vld [vmem:[#allocation10 + $0xa8] sm:$0xff]
    %v967 = vld [vmem:[#allocation10 + $0xb0] sm:$0xff]
    %v968 = vld [vmem:[#allocation10 + $0xb8] sm:$0xff]
    %v969 = vld [vmem:[#allocation10 + $0xc0] sm:$0xff]
    %v970 = vld [vmem:[#allocation10 + $0xc8] sm:$0xff]
    %v971 = vld [vmem:[#allocation10 + $0xd0] sm:$0xff]
    %v972 = vld [vmem:[#allocation10 + $0xd8] sm:$0xff]
    %v973 = vld [vmem:[#allocation10 + $0xe0] sm:$0xff]
    %v974 = vld [vmem:[#allocation10 + $0xe8] sm:$0xff]
    %v975 = vmul.f32 %v945, %v944
    %v976 = vmul.f32 %v946, %v944
    %v977 = vmul.f32 %v947, %v944
    %v978 = vmul.f32 %v948, %v944
    %v979 = vmul.f32 %v949, %v944
    %v980 = vmul.f32 %v950, %v944
    %v981 = vmul.f32 %v951, %v944
    %v982 = vmul.f32 %v952, %v944
    %v983 = vmul.f32 %v953, %v944
    %v984 = vmul.f32 %v954, %v944
    %v985 = vmul.f32 %v955, %v944
    %v986 = vmul.f32 %v956, %v944
    %v987 = vmul.f32 %v957, %v944
    %v988 = vmul.f32 %v958, %v944
    %v989 = vmul.f32 %v959, %v944
    %v990 = vmul.f32 %v960, %v944
    %v991 = vmul.f32 %v961, %v944
    %v992 = vmul.f32 %v962, %v944
    %v993 = vmul.f32 %v963, %v944
    %v994 = vmul.f32 %v964, %v944
    %v995 = vmul.f32 %v965, %v944
    %v996 = vmul.f32 %v966, %v944
    %v997 = vmul.f32 %v967, %v944
    %v998 = vmul.f32 %v968, %v944
    %v999 = vmul.f32 %v969, %v944
    %v1000 = vmul.f32 %v970, %v944
    %v1001 = vmul.f32 %v971, %v944
    %v1002 = vmul.f32 %v972, %v944
    %v1003 = vmul.f32 %v973, %v944
    %v1004 = vmul.f32 %v974, %v944
    %v1005 = vpack.c.bf16 %v976, %v975
    %v1006 = vpack.c.bf16 %v978, %v977
    %v1007 = vpack.c.bf16 %v980, %v979
    %v1008 = vpack.c.bf16 %v982, %v981
    %v1009 = vpack.c.bf16 %v984, %v983
    %v1010 = vpack.c.bf16 %v986, %v985
    %v1011 = vpack.c.bf16 %v988, %v987
    %v1012 = vpack.c.bf16 %v990, %v989
    %v1013 = vpack.c.bf16 %v992, %v991
    %v1014 = vpack.c.bf16 %v994, %v993
    %v1015 = vpack.c.bf16 %v996, %v995
    %v1016 = vpack.c.bf16 %v998, %v997
    %v1017 = vpack.c.bf16 %v1000, %v999
    %v1018 = vpack.c.bf16 %v1002, %v1001
    %v1019 = vpack.c.bf16 %v1004, %v1003
    %v1020 = vld [vmem:[#allocation8] sm:$0xf]
    %v1021 = vld [vmem:[#allocation8 + $0x4] sm:$0xf]
    %v1022 = vld [vmem:[#allocation8 + $0x8] sm:$0xf]
    %v1023 = vld [vmem:[#allocation8 + $0xc] sm:$0xf]
    %v1024 = vld [vmem:[#allocation8 + $0x10] sm:$0xf]
    %v1025 = vld [vmem:[#allocation8 + $0x14] sm:$0xf]
    %v1026 = vld [vmem:[#allocation8 + $0x18] sm:$0xf]
    %v1027 = vld [vmem:[#allocation8 + $0x1c] sm:$0xf]
    %v1028 = vld [vmem:[#allocation8 + $0x20] sm:$0xf]
    %v1029 = vld [vmem:[#allocation8 + $0x24] sm:$0xf]
    %v1030 = vld [vmem:[#allocation8 + $0x28] sm:$0xf]
    %v1031 = vld [vmem:[#allocation8 + $0x2c] sm:$0xf]
    %v1032 = vld [vmem:[#allocation8 + $0x30] sm:$0xf]
    %v1033 = vld [vmem:[#allocation8 + $0x34] sm:$0xf]
    %v1034 = vld [vmem:[#allocation8 + $0x38] sm:$0xf]
    %v1035 = vld [vmem:[#allocation8 + $0x3c] sm:$0xf]
    %v1052 = vunpack.c.l.b16 %v1020
    %v1053 = vunpack.c.l.b16 %v1021
    %v1054 = vunpack.c.l.b16 %v1022
    %v1055 = vunpack.c.l.b16 %v1023
    %v1056 = vunpack.c.l.b16 %v1024
    %v1057 = vunpack.c.l.b16 %v1025
    %v1058 = vunpack.c.l.b16 %v1026
    %v1059 = vunpack.c.l.b16 %v1027
    %v1060 = vunpack.c.l.b16 %v1028
    %v1061 = vunpack.c.l.b16 %v1029
    %v1062 = vunpack.c.l.b16 %v1030
    %v1063 = vunpack.c.l.b16 %v1031
    %v1064 = vunpack.c.l.b16 %v1032
    %v1065 = vunpack.c.l.b16 %v1033
    %v1066 = vunpack.c.l.b16 %v1034
    %v1067 = vunpack.c.l.b16 %v1035
    %v1068 = vpack.c.b16 %v1053, %v1052
    %v1069 = vpack.c.b16 %v1055, %v1054
    %v1070 = vpack.c.b16 %v1057, %v1056
    %v1071 = vpack.c.b16 %v1059, %v1058
    %v1072 = vpack.c.b16 %v1061, %v1060
    %v1073 = vpack.c.b16 %v1063, %v1062
    %v1074 = vpack.c.b16 %v1065, %v1064
    %v1075 = vpack.c.b16 %v1067, %v1066
    %1084 = vmatprep.subr.bf16.mxu0 0
    %1085 = vmatpush1.bf16.msra.mxu0 %v1075
    %1086 = vmatprep.subr.bf16.mxu0 0
    %1087 = vmatpush1.bf16.msra.mxu0 %v1074
    %1088 = vmatprep.subr.bf16.mxu0 0
    %1089 = vmatpush1.bf16.msra.mxu0 %v1073
    %1090 = vmatprep.subr.bf16.mxu0 0
    %1091 = vmatpush1.bf16.msra.mxu0 %v1072
    %1092 = vmatprep.subr.bf16.mxu0 0
    %1093 = vmatpush1.bf16.msra.mxu0 %v1071
    %1094 = vmatprep.subr.bf16.mxu0 0
    %1095 = vmatpush1.bf16.msra.mxu0 %v1070
    %1096 = vmatprep.subr.bf16.mxu0 0
    %1097 = vmatpush1.bf16.msra.mxu0 %v1069
    %1098 = vmatprep.subr.bf16.mxu0 0
    %1099 = vmatpush1.bf16.msra.mxu0 %v1068
    %1100 = vmatprep.subr.bf16.mxu0 0
    %1101 = vmatpush2.bf16.msra.mxu0 0
    %1102 = vmatprep.subr.bf16.mxu0 0
    %1103 = vmatpush2.bf16.msra.mxu0 0
    %1104 = vmatprep.subr.bf16.mxu0 0
    %1105 = vmatpush2.bf16.msra.mxu0 0
    %1106 = vmatprep.subr.bf16.mxu0 0
    %1107 = vmatpush2.bf16.msra.mxu0 0
    %1108 = vmatprep.subr.bf16.mxu0 0
    %1109 = vmatpush2.bf16.msra.mxu0 0
    %1110 = vmatprep.subr.bf16.mxu0 0
    %1111 = vmatpush2.bf16.msra.mxu0 0
    %1112 = vmatprep.subr.bf16.mxu0 0
    %1113 = vmatpush2.bf16.msra.mxu0 0
    %1114 = vmatprep.subr.bf16.mxu0 0
    %1115 = vmatpush2.bf16.msra.mxu0 0
    %1116 = vmatprep.mubr.bf16.mxu0 0
    %1117 = vmatmul.mubr.bf16.gmra.mxu0 %v1005
    %v1118 = vpop.f32.mrf.mxu0
    %v1119 = vadd.f32 0.0, %v1118
    %v1120 = vpop.f32.mrf.mxu0
    %v1121 = vpop.f32.mrf.mxu0
    %v1122 = vadd.f32 0.0, %v1121
    %v1123 = vpop.f32.mrf.mxu0
    %1124 = vmatprep.mubr.bf16.mxu0 0
    %1125 = vmatmul.mubr.bf16.gmra.mxu0 %v1006
    %v1126 = vpop.f32.mrf.mxu0
    %v1127 = vadd.f32 0.0, %v1126
    %v1128 = vpop.f32.mrf.mxu0
    %v1129 = vpop.f32.mrf.mxu0
    %v1130 = vadd.f32 0.0, %v1129
    %v1131 = vpop.f32.mrf.mxu0
    %1132 = vmatprep.mubr.bf16.mxu0 0
    %1133 = vmatmul.mubr.bf16.gmra.mxu0 %v1007
    %v1134 = vpop.f32.mrf.mxu0
    %v1135 = vadd.f32 0.0, %v1134
    %v1136 = vpop.f32.mrf.mxu0
    %v1137 = vpop.f32.mrf.mxu0
    %v1138 = vadd.f32 0.0, %v1137
    %v1139 = vpop.f32.mrf.mxu0
    %1140 = vmatprep.mubr.bf16.mxu0 0
    %1141 = vmatmul.mubr.bf16.gmra.mxu0 %v1008
    %v1142 = vpop.f32.mrf.mxu0
    %v1143 = vadd.f32 0.0, %v1142
    %v1144 = vpop.f32.mrf.mxu0
    %v1145 = vpop.f32.mrf.mxu0
    %v1146 = vadd.f32 0.0, %v1145
    %v1147 = vpop.f32.mrf.mxu0
    %1148 = vmatprep.mubr.bf16.mxu0 0
    %1149 = vmatmul.mubr.bf16.gmra.mxu0 %v1009
    %v1150 = vpop.f32.mrf.mxu0
    %v1151 = vadd.f32 0.0, %v1150
    %v1152 = vpop.f32.mrf.mxu0
    %v1153 = vpop.f32.mrf.mxu0
    %v1154 = vadd.f32 0.0, %v1153
    %v1155 = vpop.f32.mrf.mxu0
    %1156 = vmatprep.mubr.bf16.mxu0 0
    %1157 = vmatmul.mubr.bf16.gmra.mxu0 %v1010
    %v1158 = vpop.f32.mrf.mxu0
    %v1159 = vadd.f32 0.0, %v1158
    %v1160 = vpop.f32.mrf.mxu0
    %v1161 = vpop.f32.mrf.mxu0
    %v1162 = vadd.f32 0.0, %v1161
    %v1163 = vpop.f32.mrf.mxu0
    %1164 = vmatprep.mubr.bf16.mxu0 0
    %1165 = vmatmul.mubr.bf16.gmra.mxu0 %v1011
    %v1166 = vpop.f32.mrf.mxu0
    %v1167 = vadd.f32 0.0, %v1166
    %v1168 = vpop.f32.mrf.mxu0
    %v1169 = vpop.f32.mrf.mxu0
    %v1170 = vadd.f32 0.0, %v1169
    %v1171 = vpop.f32.mrf.mxu0
    %1172 = vmatprep.mubr.bf16.mxu0 0
    %1173 = vmatmul.mubr.bf16.gmra.mxu0 %v1012
    %v1174 = vpop.f32.mrf.mxu0
    %v1175 = vadd.f32 0.0, %v1174
    %v1176 = vpop.f32.mrf.mxu0
    %v1177 = vpop.f32.mrf.mxu0
    %v1178 = vadd.f32 0.0, %v1177
    %v1179 = vpop.f32.mrf.mxu0
    %1180 = vmatprep.mubr.bf16.mxu0 0
    %1181 = vmatmul.mubr.bf16.gmra.mxu0 %v1013
    %v1182 = vpop.f32.mrf.mxu0
    %v1183 = vadd.f32 0.0, %v1182
    %v1184 = vpop.f32.mrf.mxu0
    %v1185 = vpop.f32.mrf.mxu0
    %v1186 = vadd.f32 0.0, %v1185
    %v1187 = vpop.f32.mrf.mxu0
    %1188 = vmatprep.mubr.bf16.mxu0 0
    %1189 = vmatmul.mubr.bf16.gmra.mxu0 %v1014
    %v1190 = vpop.f32.mrf.mxu0
    %v1191 = vadd.f32 0.0, %v1190
    %v1192 = vpop.f32.mrf.mxu0
    %v1193 = vpop.f32.mrf.mxu0
    %v1194 = vadd.f32 0.0, %v1193
    %v1195 = vpop.f32.mrf.mxu0
    %1196 = vmatprep.mubr.bf16.mxu0 0
    %1197 = vmatmul.mubr.bf16.gmra.mxu0 %v1015
    %v1198 = vpop.f32.mrf.mxu0
    %v1199 = vadd.f32 0.0, %v1198
    %v1200 = vpop.f32.mrf.mxu0
    %v1201 = vpop.f32.mrf.mxu0
    %v1202 = vadd.f32 0.0, %v1201
    %v1203 = vpop.f32.mrf.mxu0
    %1204 = vmatprep.mubr.bf16.mxu0 0
    %1205 = vmatmul.mubr.bf16.gmra.mxu0 %v1016
    %v1206 = vpop.f32.mrf.mxu0
    %v1207 = vadd.f32 0.0, %v1206
    %v1208 = vpop.f32.mrf.mxu0
    %v1209 = vpop.f32.mrf.mxu0
    %v1210 = vadd.f32 0.0, %v1209
    %v1211 = vpop.f32.mrf.mxu0
    %1212 = vmatprep.mubr.bf16.mxu0 0
    %1213 = vmatmul.mubr.bf16.gmra.mxu0 %v1017
    %v1214 = vpop.f32.mrf.mxu0
    %v1215 = vadd.f32 0.0, %v1214
    %v1216 = vpop.f32.mrf.mxu0
    %v1217 = vpop.f32.mrf.mxu0
    %v1218 = vadd.f32 0.0, %v1217
    %v1219 = vpop.f32.mrf.mxu0
    %1220 = vmatprep.mubr.bf16.mxu0 0
    %1221 = vmatmul.mubr.bf16.gmra.mxu0 %v1018
    %v1222 = vpop.f32.mrf.mxu0
    %v1223 = vadd.f32 0.0, %v1222
    %v1224 = vpop.f32.mrf.mxu0
    %v1225 = vpop.f32.mrf.mxu0
    %v1226 = vadd.f32 0.0, %v1225
    %v1227 = vpop.f32.mrf.mxu0
    %1228 = vmatprep.mubr.bf16.mxu0 0
    %1229 = vmatmul.mubr.bf16.gmra.mxu0 %v1019
    %v1230 = vpop.f32.mrf.mxu0
    %v1231 = vadd.f32 0.0, %v1230
    %v1232 = vpop.f32.mrf.mxu0
    %v1233 = vpop.f32.mrf.mxu0
    %v1234 = vadd.f32 0.0, %v1233
    %v1235 = vpop.f32.mrf.mxu0
    %1236 = vdwg.mxu0
    %vm1237 = vcmp.gt.f32.partialorder %v1119, 0.0
    %vm1238 = vcmp.gt.f32.partialorder %v1122, 0.0
    %vm1239 = vcmp.gt.f32.partialorder %v1127, 0.0
    %vm1240 = vcmp.gt.f32.partialorder %v1130, 0.0
    %vm1241 = vcmp.gt.f32.partialorder %v1135, 0.0
    %vm1242 = vcmp.gt.f32.partialorder %v1138, 0.0
    %vm1243 = vcmp.gt.f32.partialorder %v1143, 0.0
    %vm1244 = vcmp.gt.f32.partialorder %v1146, 0.0
    %vm1245 = vcmp.gt.f32.partialorder %v1151, 0.0
    %vm1246 = vcmp.gt.f32.partialorder %v1154, 0.0
    %vm1247 = vcmp.gt.f32.partialorder %v1159, 0.0
    %vm1248 = vcmp.gt.f32.partialorder %v1162, 0.0
    %vm1249 = vcmp.gt.f32.partialorder %v1167, 0.0
    %vm1250 = vcmp.gt.f32.partialorder %v1170, 0.0
    %vm1251 = vcmp.gt.f32.partialorder %v1175, 0.0
    %vm1252 = vcmp.gt.f32.partialorder %v1178, 0.0
    %vm1253 = vcmp.gt.f32.partialorder %v1183, 0.0
    %vm1254 = vcmp.gt.f32.partialorder %v1186, 0.0
    %vm1255 = vcmp.gt.f32.partialorder %v1191, 0.0
    %vm1256 = vcmp.gt.f32.partialorder %v1194, 0.0
    %vm1257 = vcmp.gt.f32.partialorder %v1199, 0.0
    %vm1258 = vcmp.gt.f32.partialorder %v1202, 0.0
    %vm1259 = vcmp.gt.f32.partialorder %v1207, 0.0
    %vm1260 = vcmp.gt.f32.partialorder %v1210, 0.0
    %vm1261 = vcmp.gt.f32.partialorder %v1215, 0.0
    %vm1262 = vcmp.gt.f32.partialorder %v1218, 0.0
    %vm1263 = vcmp.gt.f32.partialorder %v1223, 0.0
    %vm1264 = vcmp.gt.f32.partialorder %v1226, 0.0
    %vm1265 = vcmp.gt.f32.partialorder %v1231, 0.0
    %vm1266 = vcmp.gt.f32.partialorder %v1234, 0.0
    %v1267 = vsel %vm1237, 1, 0
    %v1268 = vsel %vm1238, 1, 0
    %v1269 = vsel %vm1239, 1, 0
    %v1270 = vsel %vm1240, 1, 0
    %v1271 = vsel %vm1241, 1, 0
    %v1272 = vsel %vm1242, 1, 0
    %v1273 = vsel %vm1243, 1, 0
    %v1274 = vsel %vm1244, 1, 0
    %v1275 = vsel %vm1245, 1, 0
    %v1276 = vsel %vm1246, 1, 0
    %v1277 = vsel %vm1247, 1, 0
    %v1278 = vsel %vm1248, 1, 0
    %v1279 = vsel %vm1249, 1, 0
    %v1280 = vsel %vm1250, 1, 0
    %v1281 = vsel %vm1251, 1, 0
    %v1282 = vsel %vm1252, 1, 0
    %v1283 = vsel %vm1253, 1, 0
    %v1284 = vsel %vm1254, 1, 0
    %v1285 = vsel %vm1255, 1, 0
    %v1286 = vsel %vm1256, 1, 0
    %v1287 = vsel %vm1257, 1, 0
    %v1288 = vsel %vm1258, 1, 0
    %v1289 = vsel %vm1259, 1, 0
    %v1290 = vsel %vm1260, 1, 0
    %v1291 = vsel %vm1261, 1, 0
    %v1292 = vsel %vm1262, 1, 0
    %v1293 = vsel %vm1263, 1, 0
    %v1294 = vsel %vm1264, 1, 0
    %v1295 = vsel %vm1265, 1, 0
    %v1296 = vsel %vm1266, 1, 0
    %v1297 = vadd.s32 %v1267, %v1271
    %v1298 = vadd.s32 %v1268, %v1272
    %v1299 = vadd.s32 %v1269, %v1273
    %v1300 = vadd.s32 %v1270, %v1274
    %v1301 = vadd.s32 %v1297, %v1275
    %v1302 = vadd.s32 %v1298, %v1276
    %v1303 = vadd.s32 %v1299, %v1277
    %v1304 = vadd.s32 %v1300, %v1278
    %v1305 = vadd.s32 %v1301, %v1279
    %v1306 = vadd.s32 %v1302, %v1280
    %v1307 = vadd.s32 %v1303, %v1281
    %v1308 = vadd.s32 %v1304, %v1282
    %v1309 = vadd.s32 %v1305, %v1283
    %v1310 = vadd.s32 %v1306, %v1284
    %v1311 = vadd.s32 %v1307, %v1285
    %v1312 = vadd.s32 %v1308, %v1286
    %v1313 = vadd.s32 %v1309, %v1287
    %v1314 = vadd.s32 %v1310, %v1288
    %v1315 = vadd.s32 %v1311, %v1289
    %v1316 = vadd.s32 %v1312, %v1290
    %v1317 = vadd.s32 %v1313, %v1291
    %v1318 = vadd.s32 %v1314, %v1292
    %v1319 = vadd.s32 %v1315, %v1293
    %v1320 = vadd.s32 %v1316, %v1294
    %v1321 = vadd.s32 %v1317, %v1295
    %v1322 = vadd.s32 %v1318, %v1296
    %v1323 = vadd.s32 %v1321, %v1322
    %v1324 = vadd.s32 %v1319, %v1320
    %v1325 = vadd.s32 %v1323, %v1324
    %1326 = vst [vmem:[#allocation11] sm:$0xff] %v1325
    // Predicated region
    $region58: #{tpu_custom_call.1} parent=1 // pred_check
      _
    $region59: #{tpu_custom_call.1} parent=1 // pred_check_branch
      %1328 = sbr.rel (0) target = $region61
    $region60: #{tpu_custom_call.1} parent=1 // pred_region
      %s1330 = ssub.s32 128, 128
      %1331 = vsyncadd [#allocation4], %s1330
      %s1333 = sshll.u32 [#allocation11], 4
      %s1334 = int_to_ptr.vmem [resolvable:$true] %s1333
      %1336 = dma.vmem_to_hbm [thread:$0]  %s1334, 128, %s9, [#allocation4]
    $region61: #{tpu_custom_call.1} parent=1 // pred_fallthru
      _
    // Predicated region
    $region62: #{tpu_custom_call.1} parent=1 // pred_check
      _
    $region63: #{tpu_custom_call.1} parent=1 // pred_check_branch
      %1338 = sbr.rel (0) target = $region65
    $region64: #{tpu_custom_call.1} parent=1 // pred_region
      %1339 = dma.done [#allocation4], 128
    $region65: #{tpu_custom_call.1} parent=1 // pred_fallthru
      _
    %1340 = vsyncpa [#allocation3], 1
    %1341 = vsyncpa [#allocation6], 1
    %1342 = vsyncpa [#allocation9], 1
    %1343 = vsyncpa [#allocation4], 1

</llo_original>
